<compile_context>
chip_gen: v5e
topology: v5e:2x2
jax: 0.10.0
libtpu: 0.0.40
codegen_flags: <defaults>
</compile_context>

<pallas_src>
import jax
import jax.numpy as jnp
from jax import lax
from jax.experimental import pallas as pl
from jax.experimental.pallas import tpu as pltpu


def _round_up(x, m):
    return ((x + m - 1) // m) * m


def _make_mf_kernel(seg_slots, seg_rows, k_pad, d):
    """Kernel closure over static segment layout.

    seg_slots[s] = (j0, j1): rows of the (J, TB) idx/val block owned by segment s.
    seg_rows[s]  = (r0, r1): fused-table row range of segment s (8-aligned).
    """

    def kernel(idx_ref, val_ref, tab_ref, out_ref):
        tb = idx_ref.shape[1]
        f32 = jnp.float32

        # Build the transposed scatter-weight matrix wT (K_pad, TB), one
        # segment block at a time.  Each slot only scans its own segment's
        # row range (segment-restricted compares -> much less VALU work).
        blocks = []
        for (j0, j1), (r0, r1) in zip(seg_slots, seg_rows):
            rows = r1 - r0
            # Global table-row numbers for this segment, iota over sublanes.
            k_iota = lax.broadcasted_iota(jnp.int32, (rows, tb), 0) + r0
            w_seg = jnp.zeros((rows, tb), f32)
            for j in range(j0, j1):               # tiny static unroll
                idx_j = idx_ref[j:j + 1, :]        # (1, TB) -> sublane-broadcast
                val_j = val_ref[j:j + 1, :]        # (1, TB)
                w_seg = w_seg + jnp.where(idx_j == k_iota, val_j, 0.0)
            blocks.append(w_seg)
        tail = k_pad - seg_rows[-1][1]
        if tail:
            blocks.append(jnp.zeros((tail, tb), f32))
        w_t = jnp.concatenate(blocks, axis=0) if len(blocks) > 1 else blocks[0]

        # One fused MXU matmul: tableT (2D, K_pad) @ wT (K_pad, TB) -> (2D, TB).
        # N = TB fills the MXU lanes; no in-kernel transpose needed.
        y_t = jnp.dot(tab_ref[...], w_t.astype(tab_ref.dtype),
                      preferred_element_type=jnp.float32)

        # Per-row dot product: 8-aligned sublane halves, then sublane reduce.
        # Result is already lane-dense (1, TB).
        out_ref[...] = jnp.sum(y_t[:d, :] * y_t[d:, :], axis=0, keepdims=True)

    return kernel


def mf_forward(user_ids, item_ids, uf_idx, uf_val, if_idx, if_val,
               u_emb, i_emb, uf_emb, if_emb, *, tb=None,
               table_dtype=jnp.float32):
    """Raw predictions (B,), matching MatrixFactorizationModel.forward().

    tb:          batch rows per grid tile (None -> adaptive, multiple of 128).
    table_dtype: dtype of the fused embedding table / MXU operands.  Use
                 jnp.bfloat16 on v6e/v7x for bf16-native MXU throughput and
                 half the table bytes (accumulation stays f32).
    """
    f32, i32 = jnp.float32, jnp.int32
    B = user_ids.shape[0]
    NU, D = u_emb.shape
    NI = i_emb.shape[0]
    NUF = uf_emb.shape[0]
    NIF = if_emb.shape[0]
    Fu = uf_idx.shape[1]
    Fi = if_idx.shape[1]

    # ---- fused block-structured table, packed TRANSPOSED: (2D, K_pad) ------
    # Columns = fused vocabulary (each segment padded to a multiple of 8):
    #   cols [0, NU8)            rows [0, D)  : user id table^T
    #   cols [NU8, +NUF8)        rows [0, D)  : user feature table^T
    #   cols [.., +NI8)          rows [D, 2D) : item id table^T
    #   cols [.., +NIF8)         rows [D, 2D) : item feature table^T
    #   trailing cols up to K_pad (multiple of 128): zeros.
    NU8, NUF8, NI8, NIF8 = (_round_up(n, 8) for n in (NU, NUF, NI, NIF))
    off_uf = NU8
    off_i = NU8 + NUF8
    off_if = NU8 + NUF8 + NI8
    K_seg = off_if + NIF8
    K_pad = _round_up(K_seg, 128)

    def _pad_t(w, n8):                     # (n, D) -> (D, n8), zero-pad columns
        return jnp.pad(w.astype(f32), ((0, n8 - w.shape[0]), (0, 0))).T

    u_t, uf_t = _pad_t(u_emb, NU8), _pad_t(uf_emb, NUF8)
    i_t, if_t = _pad_t(i_emb, NI8), _pad_t(if_emb, NIF8)
    top = jnp.concatenate([u_t, uf_t, jnp.zeros((D, NI8 + NIF8), f32)], axis=1)
    bot = jnp.concatenate([jnp.zeros((D, NU8 + NUF8), f32), i_t, if_t], axis=1)
    table_t = jnp.concatenate([top, bot], axis=0)                  # (2D, K_seg)
    table_t = jnp.pad(table_t, ((0, 0), (0, K_pad - K_seg))).astype(table_dtype)

    # ---- combined (index, weight) slots, grouped by table segment ----------
    # Ids act as weight-1.0 "features".  Padded feature slots carry value 0.0.
    idx_all = jnp.concatenate(
        [user_ids.reshape(B, 1).astype(i32),                       # segment 0
         uf_idx.astype(i32) + off_uf,                              # segment 1
         item_ids.reshape(B, 1).astype(i32) + off_i,               # segment 2
         if_idx.astype(i32) + off_if], axis=1)                     # segment 3
    val_all = jnp.concatenate(
        [jnp.ones((B, 1), f32), uf_val.astype(f32),
         jnp.ones((B, 1), f32), if_val.astype(f32)], axis=1)       # (B, J)
    J = 2 + Fu + Fi
    seg_slots = ((0, 1), (1, 1 + Fu), (1 + Fu, 2 + Fu), (2 + Fu, J))
    seg_rows = ((0, NU8), (off_uf, off_i), (off_i, off_if), (off_if, K_seg))

    # ---- adaptive batch tile, padded batch (padded rows have zero weight) ---
    if tb is None:
        b128 = _round_up(max(B, 1), 128)
        tb = min(512, b128)
        if tb == b128 and b128 > 128:      # prefer >= 2 grid steps (v7x megacore)
            tb = _round_up(b128 // 2, 128)
    else:
        tb = _round_up(tb, 128)
    n_tiles = pl.cdiv(B, tb)
    B_pad = n_tiles * tb
    idx_t = jnp.pad(idx_all, ((0, B_pad - B), (0, 0))).T           # (J, B_pad)
    val_t = jnp.pad(val_all, ((0, B_pad - B), (0, 0))).T           # (J, B_pad)

    # ---- VMEM budget (single-buffered table + double-buffered small tiles) --
    tab_item = jnp.dtype(table_dtype).itemsize
    tab_bytes = 2 * D * K_pad * tab_item
    tile_bytes = (tb * J * 8                                  # idx + val tile
                  + tb * K_pad * (4 + tab_item)               # wT build + cast
                  + 2 * D * tb * 4 + tb * 4)                  # yT + out tile
    vmem_limit = int(min(56 << 20, max(32 << 20, 2 * (tab_bytes + 2 * tile_bytes))))

    # TODO(synk): for vocabularies where tab_bytes approaches VMEM (esp. v7x's
    # 64 MiB), keep the tables HBM-resident (BlockSpec(memory_space=pl.ANY)) and
    # DMA-gather only the B*J needed rows via scalar-prefetched indices instead
    # of the fused one-hot matmul; at this module's table sizes the resident
    # fused table wins.
    kernel = _make_mf_kernel(seg_slots, seg_rows, K_pad, D)
    out_shape = jax.ShapeDtypeStruct((1, B_pad), f32)

    def _call(table_spec):
        return pl.pallas_call(
            kernel,
            out_shape=out_shape,
            grid_spec=pltpu.PrefetchScalarGridSpec(
                num_scalar_prefetch=0,
                grid=(n_tiles,),
                in_specs=[
                    pl.BlockSpec((J, tb), lambda b: (0, b)),       # slot indices
                    pl.BlockSpec((J, tb), lambda b: (0, b)),       # slot weights
                    table_spec,                                    # fused table^T
                ],
                out_specs=pl.BlockSpec((1, tb), lambda b: (0, b)),  # lane-dense preds
            ),
            compiler_params=pltpu.CompilerParams(
                dimension_semantics=("parallel",),
                vmem_limit_bytes=vmem_limit,
            ),
        )(idx_t, val_t, table_t)

    # The fused table is grid-invariant (index_map is constant (0, 0)), so
    # single-buffer it to avoid reserving 2x its VMEM footprint.
    try:
        table_spec = pl.BlockSpec((2 * D, K_pad), lambda b: (0, 0),
                                  pipeline_mode=pl.Buffered(1))
        out = jax.block_until_ready(_call(table_spec))
    except Exception:  # fall back if this jax build rejects buffer_count=1
        table_spec = pl.BlockSpec((2 * D, K_pad), lambda b: (0, 0))
        out = _call(table_spec)

    return out[0, :B]                                              # (B,) raw preds


def mf_forward_ref(user_ids, item_ids, uf_idx, uf_val, if_idx, if_val,
                   u_emb, i_emb, uf_emb, if_emb):
    """Plain-JAX reference mirroring the PyTorch forward()."""
    ue = u_emb[user_ids] + jnp.einsum('bf,bfd->bd', uf_val, uf_emb[uf_idx])
    ie = i_emb[item_ids] + jnp.einsum('bf,bfd->bd', if_val, if_emb[if_idx])
    return jnp.sum(ue * ie, axis=1)


if __name__ == "__main__":
    # Problem sizes consistent with the module (small demo shapes)
    NUM_USERS, NUM_ITEMS = 64, 64
    NUM_USER_FEATURES, NUM_ITEM_FEATURES = 32, 32
    EMBED_DIM = 32
    B = 8          # batch
    F = 4          # max features per row (ragged lists padded to this)

    key = jax.random.PRNGKey(0)
    k = jax.random.split(key, 8)

    # nn.init.normal_(std=0.01) equivalents
    u_emb = 0.01 * jax.random.normal(k[0], (NUM_USERS, EMBED_DIM), jnp.float32)
    i_emb = 0.01 * jax.random.normal(k[1], (NUM_ITEMS, EMBED_DIM), jnp.float32)
    uf_emb = 0.01 * jax.random.normal(k[2], (NUM_USER_FEATURES, EMBED_DIM), jnp.float32)
    if_emb = 0.01 * jax.random.normal(k[3], (NUM_ITEM_FEATURES, EMBED_DIM), jnp.float32)

    user_ids = jax.random.randint(k[4], (B,), 0, NUM_USERS, jnp.int32)
    item_ids = jax.random.randint(k[5], (B,), 0, NUM_ITEMS, jnp.int32)

    # Densified ragged feature lists: padded slots get value 0.0, and the last
    # batch row has NO features at all (the "empty list -> zero vector" case).
    uf_idx = jax.random.randint(k[6], (B, F), 0, NUM_USER_FEATURES, jnp.int32)
    if_idx = jax.random.randint(k[7], (B, F), 0, NUM_ITEM_FEATURES, jnp.int32)
    uf_val = jnp.abs(0.5 + 0.1 * jax.random.normal(k[6], (B, F), jnp.float32))
    if_val = jnp.abs(0.5 + 0.1 * jax.random.normal(k[7], (B, F), jnp.float32))
    pad_mask = jnp.arange(F)[None, :] < jnp.array([4, 3, 2, 1, 4, 2, 3, 0])[:, None]
    uf_val = uf_val * pad_mask.astype(jnp.float32)
    if_val = if_val * pad_mask.astype(jnp.float32)

    ref = mf_forward_ref(user_ids, item_ids, uf_idx, uf_val, if_idx, if_val,
                         u_emb, i_emb, uf_emb, if_emb)

    # f32 table path (tight tolerance)
    pred = mf_forward(user_ids, item_ids, uf_idx, uf_val, if_idx, if_val,
                      u_emb, i_emb, uf_emb, if_emb, table_dtype=jnp.float32)
    pred = jax.block_until_ready(pred)
    assert pred.shape == (B,)
    assert jnp.allclose(pred, ref, atol=1e-5, rtol=1e-4), (pred, ref)

    # bf16 table path (bf16-native MXU on v6e/v7x, half the table bytes);
    # looser tolerance since the table/operands are rounded to bf16.
    pred_bf16 = mf_forward(user_ids, item_ids, uf_idx, uf_val, if_idx, if_val,
                           u_emb, i_emb, uf_emb, if_emb, table_dtype=jnp.bfloat16)
    pred_bf16 = jax.block_until_ready(pred_bf16)
    assert jnp.allclose(pred_bf16, ref, atol=2e-4, rtol=5e-2), (pred_bf16, ref)

    print("KERNEL_OK")
</pallas_src>

<mosaic_0001>
module attributes {stable_mosaic.version = 11 : i64} {
  func.func @kernel(%arg0: i32, %arg1: memref<10x128xi32, #tpu.memory_space<vmem>>, %arg2: memref<10x128xf32, #tpu.memory_space<vmem>>, %arg3: memref<64x256xf32, #tpu.memory_space<vmem>>, %arg4: memref<1x128xf32, #tpu.memory_space<vmem>>) attributes {dimension_semantics = [#tpu.dimension_semantics<parallel>], iteration_bounds = array<i64: 1>, scalar_prefetch = 0 : i64, scratch_operands = 0 : i64, tpu.core_type = #tpu.core_type<tc>, window_params = [{transform_indices = @transform_0, window_bounds = array<i64: 10, 128>}, {transform_indices = @transform_1, window_bounds = array<i64: 10, 128>}, {pipeline_mode = #tpu.pipeline_mode<synchronous>, transform_indices = @transform_2, window_bounds = array<i64: 64, 256>}, {transform_indices = @transform_3, window_bounds = array<i64: 1, 128>}]} {
    %0 = tpu.iota {dimensions = array<i32: 0>} : vector<64x128xi32>
    %c0_i32 = arith.constant 0 : i32
    %1 = vector.broadcast %c0_i32 : i32 to vector<64x128xi32>
    %2 = arith.addi %0, %1 : vector<64x128xi32>
    %cst = arith.constant 0.000000e+00 : f32
    %3 = vector.broadcast %cst : f32 to vector<64x128xf32>
    %c0 = arith.constant 0 : index
    %c0_0 = arith.constant 0 : index
    %4 = vector.load %arg1[%c0, %c0_0] : memref<10x128xi32, #tpu.memory_space<vmem>>, vector<1x128xi32>
    %c0_1 = arith.constant 0 : index
    %c0_2 = arith.constant 0 : index
    %5 = vector.load %arg2[%c0_1, %c0_2] : memref<10x128xf32, #tpu.memory_space<vmem>>, vector<1x128xf32>
    %6 = vector.broadcast %4 : vector<1x128xi32> to vector<64x128xi32>
    %7 = arith.cmpi eq, %6, %2 : vector<64x128xi32>
    %cst_3 = arith.constant 0.000000e+00 : f32
    %8 = vector.shape_cast %5 : vector<1x128xf32> to vector<1x128xf32>
    %9 = vector.broadcast %8 : vector<1x128xf32> to vector<64x128xf32>
    %10 = vector.broadcast %cst_3 : f32 to vector<64x128xf32>
    %11 = arith.select %7, %9, %10 : vector<64x128xi1>, vector<64x128xf32>
    %12 = arith.addf %3, %11 : vector<64x128xf32>
    %13 = tpu.iota {dimensions = array<i32: 0>} : vector<32x128xi32>
    %c64_i32 = arith.constant 64 : i32
    %14 = vector.broadcast %c64_i32 : i32 to vector<32x128xi32>
    %15 = arith.addi %13, %14 : vector<32x128xi32>
    %cst_4 = arith.constant 0.000000e+00 : f32
    %16 = vector.broadcast %cst_4 : f32 to vector<32x128xf32>
    %c1 = arith.constant 1 : index
    %c0_5 = arith.constant 0 : index
    %17 = vector.load %arg1[%c1, %c0_5] : memref<10x128xi32, #tpu.memory_space<vmem>>, vector<1x128xi32>
    %c1_6 = arith.constant 1 : index
    %c0_7 = arith.constant 0 : index
    %18 = vector.load %arg2[%c1_6, %c0_7] : memref<10x128xf32, #tpu.memory_space<vmem>>, vector<1x128xf32>
    %19 = vector.broadcast %17 : vector<1x128xi32> to vector<32x128xi32>
    %20 = arith.cmpi eq, %19, %15 : vector<32x128xi32>
    %cst_8 = arith.constant 0.000000e+00 : f32
    %21 = vector.shape_cast %18 : vector<1x128xf32> to vector<1x128xf32>
    %22 = vector.broadcast %21 : vector<1x128xf32> to vector<32x128xf32>
    %23 = vector.broadcast %cst_8 : f32 to vector<32x128xf32>
    %24 = arith.select %20, %22, %23 : vector<32x128xi1>, vector<32x128xf32>
    %25 = arith.addf %16, %24 : vector<32x128xf32>
    %c2 = arith.constant 2 : index
    %c0_9 = arith.constant 0 : index
    %26 = vector.load %arg1[%c2, %c0_9] : memref<10x128xi32, #tpu.memory_space<vmem>>, vector<1x128xi32>
    %c2_10 = arith.constant 2 : index
    %c0_11 = arith.constant 0 : index
    %27 = vector.load %arg2[%c2_10, %c0_11] : memref<10x128xf32, #tpu.memory_space<vmem>>, vector<1x128xf32>
    %28 = vector.broadcast %26 : vector<1x128xi32> to vector<32x128xi32>
    %29 = arith.cmpi eq, %28, %15 : vector<32x128xi32>
    %cst_12 = arith.constant 0.000000e+00 : f32
    %30 = vector.shape_cast %27 : vector<1x128xf32> to vector<1x128xf32>
    %31 = vector.broadcast %30 : vector<1x128xf32> to vector<32x128xf32>
    %32 = vector.broadcast %cst_12 : f32 to vector<32x128xf32>
    %33 = arith.select %29, %31, %32 : vector<32x128xi1>, vector<32x128xf32>
    %34 = arith.addf %25, %33 : vector<32x128xf32>
    %c3 = arith.constant 3 : index
    %c0_13 = arith.constant 0 : index
    %35 = vector.load %arg1[%c3, %c0_13] : memref<10x128xi32, #tpu.memory_space<vmem>>, vector<1x128xi32>
    %c3_14 = arith.constant 3 : index
    %c0_15 = arith.constant 0 : index
    %36 = vector.load %arg2[%c3_14, %c0_15] : memref<10x128xf32, #tpu.memory_space<vmem>>, vector<1x128xf32>
    %37 = vector.broadcast %35 : vector<1x128xi32> to vector<32x128xi32>
    %38 = arith.cmpi eq, %37, %15 : vector<32x128xi32>
    %cst_16 = arith.constant 0.000000e+00 : f32
    %39 = vector.shape_cast %36 : vector<1x128xf32> to vector<1x128xf32>
    %40 = vector.broadcast %39 : vector<1x128xf32> to vector<32x128xf32>
    %41 = vector.broadcast %cst_16 : f32 to vector<32x128xf32>
    %42 = arith.select %38, %40, %41 : vector<32x128xi1>, vector<32x128xf32>
    %43 = arith.addf %34, %42 : vector<32x128xf32>
    %c4 = arith.constant 4 : index
    %c0_17 = arith.constant 0 : index
    %44 = vector.load %arg1[%c4, %c0_17] : memref<10x128xi32, #tpu.memory_space<vmem>>, vector<1x128xi32>
    %c4_18 = arith.constant 4 : index
    %c0_19 = arith.constant 0 : index
    %45 = vector.load %arg2[%c4_18, %c0_19] : memref<10x128xf32, #tpu.memory_space<vmem>>, vector<1x128xf32>
    %46 = vector.broadcast %44 : vector<1x128xi32> to vector<32x128xi32>
    %47 = arith.cmpi eq, %46, %15 : vector<32x128xi32>
    %cst_20 = arith.constant 0.000000e+00 : f32
    %48 = vector.shape_cast %45 : vector<1x128xf32> to vector<1x128xf32>
    %49 = vector.broadcast %48 : vector<1x128xf32> to vector<32x128xf32>
    %50 = vector.broadcast %cst_20 : f32 to vector<32x128xf32>
    %51 = arith.select %47, %49, %50 : vector<32x128xi1>, vector<32x128xf32>
    %52 = arith.addf %43, %51 : vector<32x128xf32>
    %53 = tpu.iota {dimensions = array<i32: 0>} : vector<64x128xi32>
    %c96_i32 = arith.constant 96 : i32
    %54 = vector.broadcast %c96_i32 : i32 to vector<64x128xi32>
    %55 = arith.addi %53, %54 : vector<64x128xi32>
    %cst_21 = arith.constant 0.000000e+00 : f32
    %56 = vector.broadcast %cst_21 : f32 to vector<64x128xf32>
    %c5 = arith.constant 5 : index
    %c0_22 = arith.constant 0 : index
    %57 = vector.load %arg1[%c5, %c0_22] : memref<10x128xi32, #tpu.memory_space<vmem>>, vector<1x128xi32>
    %c5_23 = arith.constant 5 : index
    %c0_24 = arith.constant 0 : index
    %58 = vector.load %arg2[%c5_23, %c0_24] : memref<10x128xf32, #tpu.memory_space<vmem>>, vector<1x128xf32>
    %59 = vector.broadcast %57 : vector<1x128xi32> to vector<64x128xi32>
    %60 = arith.cmpi eq, %59, %55 : vector<64x128xi32>
    %cst_25 = arith.constant 0.000000e+00 : f32
    %61 = vector.shape_cast %58 : vector<1x128xf32> to vector<1x128xf32>
    %62 = vector.broadcast %61 : vector<1x128xf32> to vector<64x128xf32>
    %63 = vector.broadcast %cst_25 : f32 to vector<64x128xf32>
    %64 = arith.select %60, %62, %63 : vector<64x128xi1>, vector<64x128xf32>
    %65 = arith.addf %56, %64 : vector<64x128xf32>
    %66 = tpu.iota {dimensions = array<i32: 0>} : vector<32x128xi32>
    %c160_i32 = arith.constant 160 : i32
    %67 = vector.broadcast %c160_i32 : i32 to vector<32x128xi32>
    %68 = arith.addi %66, %67 : vector<32x128xi32>
    %cst_26 = arith.constant 0.000000e+00 : f32
    %69 = vector.broadcast %cst_26 : f32 to vector<32x128xf32>
    %c6 = arith.constant 6 : index
    %c0_27 = arith.constant 0 : index
    %70 = vector.load %arg1[%c6, %c0_27] : memref<10x128xi32, #tpu.memory_space<vmem>>, vector<1x128xi32>
    %c6_28 = arith.constant 6 : index
    %c0_29 = arith.constant 0 : index
    %71 = vector.load %arg2[%c6_28, %c0_29] : memref<10x128xf32, #tpu.memory_space<vmem>>, vector<1x128xf32>
    %72 = vector.broadcast %70 : vector<1x128xi32> to vector<32x128xi32>
    %73 = arith.cmpi eq, %72, %68 : vector<32x128xi32>
    %cst_30 = arith.constant 0.000000e+00 : f32
    %74 = vector.shape_cast %71 : vector<1x128xf32> to vector<1x128xf32>
    %75 = vector.broadcast %74 : vector<1x128xf32> to vector<32x128xf32>
    %76 = vector.broadcast %cst_30 : f32 to vector<32x128xf32>
    %77 = arith.select %73, %75, %76 : vector<32x128xi1>, vector<32x128xf32>
    %78 = arith.addf %69, %77 : vector<32x128xf32>
    %c7 = arith.constant 7 : index
    %c0_31 = arith.constant 0 : index
    %79 = vector.load %arg1[%c7, %c0_31] : memref<10x128xi32, #tpu.memory_space<vmem>>, vector<1x128xi32>
    %c7_32 = arith.constant 7 : index
    %c0_33 = arith.constant 0 : index
    %80 = vector.load %arg2[%c7_32, %c0_33] : memref<10x128xf32, #tpu.memory_space<vmem>>, vector<1x128xf32>
    %81 = vector.broadcast %79 : vector<1x128xi32> to vector<32x128xi32>
    %82 = arith.cmpi eq, %81, %68 : vector<32x128xi32>
    %cst_34 = arith.constant 0.000000e+00 : f32
    %83 = vector.shape_cast %80 : vector<1x128xf32> to vector<1x128xf32>
    %84 = vector.broadcast %83 : vector<1x128xf32> to vector<32x128xf32>
    %85 = vector.broadcast %cst_34 : f32 to vector<32x128xf32>
    %86 = arith.select %82, %84, %85 : vector<32x128xi1>, vector<32x128xf32>
    %87 = arith.addf %78, %86 : vector<32x128xf32>
    %c8 = arith.constant 8 : index
    %c0_35 = arith.constant 0 : index
    %88 = vector.load %arg1[%c8, %c0_35] : memref<10x128xi32, #tpu.memory_space<vmem>>, vector<1x128xi32>
    %c8_36 = arith.constant 8 : index
    %c0_37 = arith.constant 0 : index
    %89 = vector.load %arg2[%c8_36, %c0_37] : memref<10x128xf32, #tpu.memory_space<vmem>>, vector<1x128xf32>
    %90 = vector.broadcast %88 : vector<1x128xi32> to vector<32x128xi32>
    %91 = arith.cmpi eq, %90, %68 : vector<32x128xi32>
    %cst_38 = arith.constant 0.000000e+00 : f32
    %92 = vector.shape_cast %89 : vector<1x128xf32> to vector<1x128xf32>
    %93 = vector.broadcast %92 : vector<1x128xf32> to vector<32x128xf32>
    %94 = vector.broadcast %cst_38 : f32 to vector<32x128xf32>
    %95 = arith.select %91, %93, %94 : vector<32x128xi1>, vector<32x128xf32>
    %96 = arith.addf %87, %95 : vector<32x128xf32>
    %c9 = arith.constant 9 : index
    %c0_39 = arith.constant 0 : index
    %97 = vector.load %arg1[%c9, %c0_39] : memref<10x128xi32, #tpu.memory_space<vmem>>, vector<1x128xi32>
    %c9_40 = arith.constant 9 : index
    %c0_41 = arith.constant 0 : index
    %98 = vector.load %arg2[%c9_40, %c0_41] : memref<10x128xf32, #tpu.memory_space<vmem>>, vector<1x128xf32>
    %99 = vector.broadcast %97 : vector<1x128xi32> to vector<32x128xi32>
    %100 = arith.cmpi eq, %99, %68 : vector<32x128xi32>
    %cst_42 = arith.constant 0.000000e+00 : f32
    %101 = vector.shape_cast %98 : vector<1x128xf32> to vector<1x128xf32>
    %102 = vector.broadcast %101 : vector<1x128xf32> to vector<32x128xf32>
    %103 = vector.broadcast %cst_42 : f32 to vector<32x128xf32>
    %104 = arith.select %100, %102, %103 : vector<32x128xi1>, vector<32x128xf32>
    %105 = arith.addf %96, %104 : vector<32x128xf32>
    %cst_43 = arith.constant 0.000000e+00 : f32
    %106 = vector.broadcast %cst_43 : f32 to vector<64x128xf32>
    %107 = tpu.concatenate %12, %52, %65, %105, %106 in 0 : vector<64x128xf32>, vector<32x128xf32>, vector<64x128xf32>, vector<32x128xf32>, vector<64x128xf32> -> vector<256x128xf32>
    %c0_44 = arith.constant 0 : index
    %c0_45 = arith.constant 0 : index
    %108 = vector.load %arg3[%c0_44, %c0_45] : memref<64x256xf32, #tpu.memory_space<vmem>>, vector<64x256xf32>
    %cst_46 = arith.constant dense<0.000000e+00> : vector<64x128xf32>
    %109 = tpu.matmul %108, %107, %cst_46 {dimension_numbers = #tpu.dot_dimension_numbers<[1], [0], [0], [1], [0, 0, 1, 1], [], []>} : vector<64x256xf32>, vector<256x128xf32>, vector<64x128xf32> -> vector<64x128xf32>
    %110 = vector.extract_strided_slice %109 {offsets = [0, 0], sizes = [32, 128], strides = [1, 1]} : vector<64x128xf32> to vector<32x128xf32>
    %111 = vector.extract_strided_slice %109 {offsets = [32, 0], sizes = [32, 128], strides = [1, 1]} : vector<64x128xf32> to vector<32x128xf32>
    %112 = arith.mulf %110, %111 : vector<32x128xf32>
    %cst_47 = arith.constant dense<0.000000e+00> : vector<128xf32>
    %113 = vector.multi_reduction <add>, %112, %cst_47 [0] : vector<32x128xf32> to vector<128xf32>
    %114 = vector.shape_cast %113 : vector<128xf32> to vector<1x128xf32>
    %c0_48 = arith.constant 0 : index
    %c0_49 = arith.constant 0 : index
    %115 = vector.load %arg4[%c0_48, %c0_49] : memref<1x128xf32, #tpu.memory_space<vmem>>, vector<1x128xf32>
    tpu.vector_store %arg4[%c0_48, %c0_49], %114 {strides = array<i32>} : memref<1x128xf32, #tpu.memory_space<vmem>>, vector<1x128xf32>,
    return
  }
  func.func @transform_0(%arg0: i32) -> (i32, i32) {
    %c0_i32 = arith.constant 0 : i32
    %c0_i32_0 = arith.constant 0 : i32
    return %c0_i32, %arg0 : i32, i32
  }
  func.func @transform_1(%arg0: i32) -> (i32, i32) {
    %c0_i32 = arith.constant 0 : i32
    %c0_i32_0 = arith.constant 0 : i32
    return %c0_i32, %arg0 : i32, i32
  }
  func.func @transform_2(%arg0: i32) -> (i32, i32) {
    %c0_i32 = arith.constant 0 : i32
    %c0_i32_0 = arith.constant 0 : i32
    %c0_i32_1 = arith.constant 0 : i32
    return %c0_i32, %c0_i32_0 : i32, i32
  }
  func.func @transform_3(%arg0: i32) -> (i32, i32) {
    %c0_i32 = arith.constant 0 : i32
    %c0_i32_0 = arith.constant 0 : i32
    return %c0_i32, %arg0 : i32, i32
  }
}

module attributes {stable_mosaic.version = 11 : i64} {
  func.func @kernel(%arg0: i32, %arg1: memref<10x128xi32, #tpu.memory_space<vmem>>, %arg2: memref<10x128xf32, #tpu.memory_space<vmem>>, %arg3: memref<64x256xf32, #tpu.memory_space<vmem>>, %arg4: memref<1x128xf32, #tpu.memory_space<vmem>>) attributes {dimension_semantics = [#tpu.dimension_semantics<parallel>], iteration_bounds = array<i64: 1>, scalar_prefetch = 0 : i64, scratch_operands = 0 : i64, tpu.core_type = #tpu.core_type<tc>, window_params = [{transform_indices = @transform_0, window_bounds = array<i64: 10, 128>}, {transform_indices = @transform_1, window_bounds = array<i64: 10, 128>}, {pipeline_mode = #tpu.pipeline_mode<synchronous>, transform_indices = @transform_2, window_bounds = array<i64: 64, 256>}, {transform_indices = @transform_3, window_bounds = array<i64: 1, 128>}]} {
    %0 = tpu.iota {dimensions = array<i32: 0>} : vector<64x128xi32>
    %c0_i32 = arith.constant 0 : i32
    %1 = vector.broadcast %c0_i32 : i32 to vector<64x128xi32>
    %2 = arith.addi %0, %1 : vector<64x128xi32>
    %cst = arith.constant 0.000000e+00 : f32
    %3 = vector.broadcast %cst : f32 to vector<64x128xf32>
    %c0 = arith.constant 0 : index
    %c0_0 = arith.constant 0 : index
    %4 = vector.load %arg1[%c0, %c0_0] : memref<10x128xi32, #tpu.memory_space<vmem>>, vector<1x128xi32>
    %c0_1 = arith.constant 0 : index
    %c0_2 = arith.constant 0 : index
    %5 = vector.load %arg2[%c0_1, %c0_2] : memref<10x128xf32, #tpu.memory_space<vmem>>, vector<1x128xf32>
    %6 = vector.broadcast %4 : vector<1x128xi32> to vector<64x128xi32>
    %7 = arith.cmpi eq, %6, %2 : vector<64x128xi32>
    %cst_3 = arith.constant 0.000000e+00 : f32
    %8 = vector.shape_cast %5 : vector<1x128xf32> to vector<1x128xf32>
    %9 = vector.broadcast %8 : vector<1x128xf32> to vector<64x128xf32>
    %10 = vector.broadcast %cst_3 : f32 to vector<64x128xf32>
    %11 = arith.select %7, %9, %10 : vector<64x128xi1>, vector<64x128xf32>
    %12 = arith.addf %3, %11 : vector<64x128xf32>
    %13 = tpu.iota {dimensions = array<i32: 0>} : vector<32x128xi32>
    %c64_i32 = arith.constant 64 : i32
    %14 = vector.broadcast %c64_i32 : i32 to vector<32x128xi32>
    %15 = arith.addi %13, %14 : vector<32x128xi32>
    %cst_4 = arith.constant 0.000000e+00 : f32
    %16 = vector.broadcast %cst_4 : f32 to vector<32x128xf32>
    %c1 = arith.constant 1 : index
    %c0_5 = arith.constant 0 : index
    %17 = vector.load %arg1[%c1, %c0_5] : memref<10x128xi32, #tpu.memory_space<vmem>>, vector<1x128xi32>
    %c1_6 = arith.constant 1 : index
    %c0_7 = arith.constant 0 : index
    %18 = vector.load %arg2[%c1_6, %c0_7] : memref<10x128xf32, #tpu.memory_space<vmem>>, vector<1x128xf32>
    %19 = vector.broadcast %17 : vector<1x128xi32> to vector<32x128xi32>
    %20 = arith.cmpi eq, %19, %15 : vector<32x128xi32>
    %cst_8 = arith.constant 0.000000e+00 : f32
    %21 = vector.shape_cast %18 : vector<1x128xf32> to vector<1x128xf32>
    %22 = vector.broadcast %21 : vector<1x128xf32> to vector<32x128xf32>
    %23 = vector.broadcast %cst_8 : f32 to vector<32x128xf32>
    %24 = arith.select %20, %22, %23 : vector<32x128xi1>, vector<32x128xf32>
    %25 = arith.addf %16, %24 : vector<32x128xf32>
    %c2 = arith.constant 2 : index
    %c0_9 = arith.constant 0 : index
    %26 = vector.load %arg1[%c2, %c0_9] : memref<10x128xi32, #tpu.memory_space<vmem>>, vector<1x128xi32>
    %c2_10 = arith.constant 2 : index
    %c0_11 = arith.constant 0 : index
    %27 = vector.load %arg2[%c2_10, %c0_11] : memref<10x128xf32, #tpu.memory_space<vmem>>, vector<1x128xf32>
    %28 = vector.broadcast %26 : vector<1x128xi32> to vector<32x128xi32>
    %29 = arith.cmpi eq, %28, %15 : vector<32x128xi32>
    %cst_12 = arith.constant 0.000000e+00 : f32
    %30 = vector.shape_cast %27 : vector<1x128xf32> to vector<1x128xf32>
    %31 = vector.broadcast %30 : vector<1x128xf32> to vector<32x128xf32>
    %32 = vector.broadcast %cst_12 : f32 to vector<32x128xf32>
    %33 = arith.select %29, %31, %32 : vector<32x128xi1>, vector<32x128xf32>
    %34 = arith.addf %25, %33 : vector<32x128xf32>
    %c3 = arith.constant 3 : index
    %c0_13 = arith.constant 0 : index
    %35 = vector.load %arg1[%c3, %c0_13] : memref<10x128xi32, #tpu.memory_space<vmem>>, vector<1x128xi32>
    %c3_14 = arith.constant 3 : index
    %c0_15 = arith.constant 0 : index
    %36 = vector.load %arg2[%c3_14, %c0_15] : memref<10x128xf32, #tpu.memory_space<vmem>>, vector<1x128xf32>
    %37 = vector.broadcast %35 : vector<1x128xi32> to vector<32x128xi32>
    %38 = arith.cmpi eq, %37, %15 : vector<32x128xi32>
    %cst_16 = arith.constant 0.000000e+00 : f32
    %39 = vector.shape_cast %36 : vector<1x128xf32> to vector<1x128xf32>
    %40 = vector.broadcast %39 : vector<1x128xf32> to vector<32x128xf32>
    %41 = vector.broadcast %cst_16 : f32 to vector<32x128xf32>
    %42 = arith.select %38, %40, %41 : vector<32x128xi1>, vector<32x128xf32>
    %43 = arith.addf %34, %42 : vector<32x128xf32>
    %c4 = arith.constant 4 : index
    %c0_17 = arith.constant 0 : index
    %44 = vector.load %arg1[%c4, %c0_17] : memref<10x128xi32, #tpu.memory_space<vmem>>, vector<1x128xi32>
    %c4_18 = arith.constant 4 : index
    %c0_19 = arith.constant 0 : index
    %45 = vector.load %arg2[%c4_18, %c0_19] : memref<10x128xf32, #tpu.memory_space<vmem>>, vector<1x128xf32>
    %46 = vector.broadcast %44 : vector<1x128xi32> to vector<32x128xi32>
    %47 = arith.cmpi eq, %46, %15 : vector<32x128xi32>
    %cst_20 = arith.constant 0.000000e+00 : f32
    %48 = vector.shape_cast %45 : vector<1x128xf32> to vector<1x128xf32>
    %49 = vector.broadcast %48 : vector<1x128xf32> to vector<32x128xf32>
    %50 = vector.broadcast %cst_20 : f32 to vector<32x128xf32>
    %51 = arith.select %47, %49, %50 : vector<32x128xi1>, vector<32x128xf32>
    %52 = arith.addf %43, %51 : vector<32x128xf32>
    %53 = tpu.iota {dimensions = array<i32: 0>} : vector<64x128xi32>
    %c96_i32 = arith.constant 96 : i32
    %54 = vector.broadcast %c96_i32 : i32 to vector<64x128xi32>
    %55 = arith.addi %53, %54 : vector<64x128xi32>
    %cst_21 = arith.constant 0.000000e+00 : f32
    %56 = vector.broadcast %cst_21 : f32 to vector<64x128xf32>
    %c5 = arith.constant 5 : index
    %c0_22 = arith.constant 0 : index
    %57 = vector.load %arg1[%c5, %c0_22] : memref<10x128xi32, #tpu.memory_space<vmem>>, vector<1x128xi32>
    %c5_23 = arith.constant 5 : index
    %c0_24 = arith.constant 0 : index
    %58 = vector.load %arg2[%c5_23, %c0_24] : memref<10x128xf32, #tpu.memory_space<vmem>>, vector<1x128xf32>
    %59 = vector.broadcast %57 : vector<1x128xi32> to vector<64x128xi32>
    %60 = arith.cmpi eq, %59, %55 : vector<64x128xi32>
    %cst_25 = arith.constant 0.000000e+00 : f32
    %61 = vector.shape_cast %58 : vector<1x128xf32> to vector<1x128xf32>
    %62 = vector.broadcast %61 : vector<1x128xf32> to vector<64x128xf32>
    %63 = vector.broadcast %cst_25 : f32 to vector<64x128xf32>
    %64 = arith.select %60, %62, %63 : vector<64x128xi1>, vector<64x128xf32>
    %65 = arith.addf %56, %64 : vector<64x128xf32>
    %66 = tpu.iota {dimensions = array<i32: 0>} : vector<32x128xi32>
    %c160_i32 = arith.constant 160 : i32
    %67 = vector.broadcast %c160_i32 : i32 to vector<32x128xi32>
    %68 = arith.addi %66, %67 : vector<32x128xi32>
    %cst_26 = arith.constant 0.000000e+00 : f32
    %69 = vector.broadcast %cst_26 : f32 to vector<32x128xf32>
    %c6 = arith.constant 6 : index
    %c0_27 = arith.constant 0 : index
    %70 = vector.load %arg1[%c6, %c0_27] : memref<10x128xi32, #tpu.memory_space<vmem>>, vector<1x128xi32>
    %c6_28 = arith.constant 6 : index
    %c0_29 = arith.constant 0 : index
    %71 = vector.load %arg2[%c6_28, %c0_29] : memref<10x128xf32, #tpu.memory_space<vmem>>, vector<1x128xf32>
    %72 = vector.broadcast %70 : vector<1x128xi32> to vector<32x128xi32>
    %73 = arith.cmpi eq, %72, %68 : vector<32x128xi32>
    %cst_30 = arith.constant 0.000000e+00 : f32
    %74 = vector.shape_cast %71 : vector<1x128xf32> to vector<1x128xf32>
    %75 = vector.broadcast %74 : vector<1x128xf32> to vector<32x128xf32>
    %76 = vector.broadcast %cst_30 : f32 to vector<32x128xf32>
    %77 = arith.select %73, %75, %76 : vector<32x128xi1>, vector<32x128xf32>
    %78 = arith.addf %69, %77 : vector<32x128xf32>
    %c7 = arith.constant 7 : index
    %c0_31 = arith.constant 0 : index
    %79 = vector.load %arg1[%c7, %c0_31] : memref<10x128xi32, #tpu.memory_space<vmem>>, vector<1x128xi32>
    %c7_32 = arith.constant 7 : index
    %c0_33 = arith.constant 0 : index
    %80 = vector.load %arg2[%c7_32, %c0_33] : memref<10x128xf32, #tpu.memory_space<vmem>>, vector<1x128xf32>
    %81 = vector.broadcast %79 : vector<1x128xi32> to vector<32x128xi32>
    %82 = arith.cmpi eq, %81, %68 : vector<32x128xi32>
    %cst_34 = arith.constant 0.000000e+00 : f32
    %83 = vector.shape_cast %80 : vector<1x128xf32> to vector<1x128xf32>
    %84 = vector.broadcast %83 : vector<1x128xf32> to vector<32x128xf32>
    %85 = vector.broadcast %cst_34 : f32 to vector<32x128xf32>
    %86 = arith.select %82, %84, %85 : vector<32x128xi1>, vector<32x128xf32>
    %87 = arith.addf %78, %86 : vector<32x128xf32>
    %c8 = arith.constant 8 : index
    %c0_35 = arith.constant 0 : index
    %88 = vector.load %arg1[%c8, %c0_35] : memref<10x128xi32, #tpu.memory_space<vmem>>, vector<1x128xi32>
    %c8_36 = arith.constant 8 : index
    %c0_37 = arith.constant 0 : index
    %89 = vector.load %arg2[%c8_36, %c0_37] : memref<10x128xf32, #tpu.memory_space<vmem>>, vector<1x128xf32>
    %90 = vector.broadcast %88 : vector<1x128xi32> to vector<32x128xi32>
    %91 = arith.cmpi eq, %90, %68 : vector<32x128xi32>
    %cst_38 = arith.constant 0.000000e+00 : f32
    %92 = vector.shape_cast %89 : vector<1x128xf32> to vector<1x128xf32>
    %93 = vector.broadcast %92 : vector<1x128xf32> to vector<32x128xf32>
    %94 = vector.broadcast %cst_38 : f32 to vector<32x128xf32>
    %95 = arith.select %91, %93, %94 : vector<32x128xi1>, vector<32x128xf32>
    %96 = arith.addf %87, %95 : vector<32x128xf32>
    %c9 = arith.constant 9 : index
    %c0_39 = arith.constant 0 : index
    %97 = vector.load %arg1[%c9, %c0_39] : memref<10x128xi32, #tpu.memory_space<vmem>>, vector<1x128xi32>
    %c9_40 = arith.constant 9 : index
    %c0_41 = arith.constant 0 : index
    %98 = vector.load %arg2[%c9_40, %c0_41] : memref<10x128xf32, #tpu.memory_space<vmem>>, vector<1x128xf32>
    %99 = vector.broadcast %97 : vector<1x128xi32> to vector<32x128xi32>
    %100 = arith.cmpi eq, %99, %68 : vector<32x128xi32>
    %cst_42 = arith.constant 0.000000e+00 : f32
    %101 = vector.shape_cast %98 : vector<1x128xf32> to vector<1x128xf32>
    %102 = vector.broadcast %101 : vector<1x128xf32> to vector<32x128xf32>
    %103 = vector.broadcast %cst_42 : f32 to vector<32x128xf32>
    %104 = arith.select %100, %102, %103 : vector<32x128xi1>, vector<32x128xf32>
    %105 = arith.addf %96, %104 : vector<32x128xf32>
    %cst_43 = arith.constant 0.000000e+00 : f32
    %106 = vector.broadcast %cst_43 : f32 to vector<64x128xf32>
    %107 = tpu.concatenate %12, %52, %65, %105, %106 in 0 : vector<64x128xf32>, vector<32x128xf32>, vector<64x128xf32>, vector<32x128xf32>, vector<64x128xf32> -> vector<256x128xf32>
    %c0_44 = arith.constant 0 : index
    %c0_45 = arith.constant 0 : index
    %108 = vector.load %arg3[%c0_44, %c0_45] : memref<64x256xf32, #tpu.memory_space<vmem>>, vector<64x256xf32>
    %cst_46 = arith.constant dense<0.000000e+00> : vector<64x128xf32>
    %109 = tpu.matmul %108, %107, %cst_46 {dimension_numbers = #tpu.dot_dimension_numbers<[1], [0], [0], [1], [0, 0, 1, 1], [], []>} : vector<64x256xf32>, vector<256x128xf32>, vector<64x128xf32> -> vector<64x128xf32>
    %110 = vector.extract_strided_slice %109 {offsets = [0, 0], sizes = [32, 128], strides = [1, 1]} : vector<64x128xf32> to vector<32x128xf32>
    %111 = vector.extract_strided_slice %109 {offsets = [32, 0], sizes = [32, 128], strides = [1, 1]} : vector<64x128xf32> to vector<32x128xf32>
    %112 = arith.mulf %110, %111 : vector<32x128xf32>
    %cst_47 = arith.constant dense<0.000000e+00> : vector<128xf32>
    %113 = vector.multi_reduction <add>, %112, %cst_47 [0] : vector<32x128xf32> to vector<128xf32>
    %114 = vector.shape_cast %113 : vector<128xf32> to vector<1x128xf32>
    %c0_48 = arith.constant 0 : index
    %c0_49 = arith.constant 0 : index
    %115 = vector.load %arg4[%c0_48, %c0_49] : memref<1x128xf32, #tpu.memory_space<vmem>>, vector<1x128xf32>
    tpu.vector_store %arg4[%c0_48, %c0_49], %114 {strides = array<i32>} : memref<1x128xf32, #tpu.memory_space<vmem>>, vector<1x128xf32>,
    return
  }
  func.func @transform_0(%arg0: i32) -> (i32, i32) {
    %c0_i32 = arith.constant 0 : i32
    %c0_i32_0 = arith.constant 0 : i32
    return %c0_i32, %arg0 : i32, i32
  }
  func.func @transform_1(%arg0: i32) -> (i32, i32) {
    %c0_i32 = arith.constant 0 : i32
    %c0_i32_0 = arith.constant 0 : i32
    return %c0_i32, %arg0 : i32, i32
  }
  func.func @transform_2(%arg0: i32) -> (i32, i32) {
    %c0_i32 = arith.constant 0 : i32
    %c0_i32_0 = arith.constant 0 : i32
    %c0_i32_1 = arith.constant 0 : i32
    return %c0_i32, %c0_i32_0 : i32, i32
  }
  func.func @transform_3(%arg0: i32) -> (i32, i32) {
    %c0_i32 = arith.constant 0 : i32
    %c0_i32_0 = arith.constant 0 : i32
    return %c0_i32, %arg0 : i32, i32
  }
}

</mosaic_0001>

<llo_original>
// kernel: tpu_custom_call.1
$region0: #{tpu_custom_call.1}
  #allocation0 [shape = 'u32[]', space=smem, size = 0x4, offset = 0x4, fixed_abs, tag = 'smem constant byte address 0x4 - core index']
  #allocation1 [shape = 'u32[72,128]{1,0:T(1,128)}', space=vmem, size = 0x9000, scoped, tag = 'internal scratch']
  %s0 = inlined_call_operand.hbm [shape: s32[10,128], index: 0, kind: input, shape index: {}]
  %s1 = inlined_call_operand.hbm [shape: f32[10,128], index: 1, kind: input, shape index: {}]
  %s2 = inlined_call_operand.hbm [shape: f32[64,256], index: 2, kind: input, shape index: {}]
  %s3 = inlined_call_operand.hbm [shape: f32[1,128], index: 3, kind: output, shape index: {}]
  %s4 = sld [smem:[#allocation0]]
  $region34: #{tpu_custom_call.1} parent=0
    _
  %s6 = ssub.s32 1, %s4
  %s7 = scalar_select 0, %s6, %s4
  $region1: #{tpu_custom_call.1} parent=0
    #allocation2 [shape = 'u8[8192]{0}', space=vmem, size = 0x2000, scoped, tag = 'input window, operand 0, single buffered']
    #allocation3 [shape = 's32[1]{0}', space=sflag, size = 0x4, scoped, tag = 'scoped memory for tpu_custom_call.1']
    #allocation4 [shape = 's32[1]{0}', space=sflag, size = 0x4, scoped, tag = 'scoped memory for tpu_custom_call.1']
    #allocation5 [shape = 'u8[8192]{0}', space=vmem, size = 0x2000, scoped, tag = 'input window, operand 1, single buffered']
    #allocation6 [shape = 's32[1]{0}', space=sflag, size = 0x4, scoped, tag = 'scoped memory for tpu_custom_call.1']
    #allocation7 [shape = 'u8[65536]{0}', space=vmem, size = 0x10000, scoped, tag = 'input window, operand 2, single buffered']
    #allocation8 [shape = 'u8[512]{0}', space=vmem, size = 0x400, scoped, tag = 'output window, operand 0, single buffered']
    %8 = vsyncpa [#allocation3], 0
    %9 = vsyncpa [#allocation6], 0
    %10 = vsyncpa [#allocation4], 0
    // Predicated region
    $region2: #{tpu_custom_call.1} parent=1 // pred_check
      _
    $region3: #{tpu_custom_call.1} parent=1 // pred_check_branch
      %12 = sbr.rel (0) target = $region5
    $region4: #{tpu_custom_call.1} parent=1 // pred_region
      %14 = vsyncadd [#allocation3], 0
      %s15 = sshll.u32 %s0, 4
      %s16 = int_to_ptr.hbm [resolvable:$true] %s15
      %s17 = sshll.u32 [#allocation2], 4
      %s18 = int_to_ptr.vmem [resolvable:$true] %s17
      %23 = dma.hbm_to_vmem [thread:$0]  %s16, 256, %s18, [#allocation3], 128, 128, 8
    $region5: #{tpu_custom_call.1} parent=1 // pred_fallthru
      _
    // Predicated region
    $region6: #{tpu_custom_call.1} parent=1 // pred_check
      _
    $region7: #{tpu_custom_call.1} parent=1 // pred_check_branch
      %25 = sbr.rel (0) target = $region9
    $region8: #{tpu_custom_call.1} parent=1 // pred_region
      %27 = vsyncadd [#allocation6], 0
      %s28 = sshll.u32 %s1, 4
      %s29 = int_to_ptr.hbm [resolvable:$true] %s28
      %s30 = sshll.u32 [#allocation5], 4
      %s31 = int_to_ptr.vmem [resolvable:$true] %s30
      %36 = dma.hbm_to_vmem [thread:$0]  %s29, 256, %s31, [#allocation6], 128, 128, 8
    $region9: #{tpu_custom_call.1} parent=1 // pred_fallthru
      _
    // Predicated region
    $region10: #{tpu_custom_call.1} parent=1 // pred_check
      _
    $region11: #{tpu_custom_call.1} parent=1 // pred_check_branch
      %38 = sbr.rel (0) target = $region13
    $region12: #{tpu_custom_call.1} parent=1 // pred_region
      %40 = vsyncadd [#allocation6], 0
      %s41 = sshll.u32 %s2, 4
      %s42 = int_to_ptr.hbm [resolvable:$true] %s41
      %s43 = sshll.u32 [#allocation7], 4
      %s44 = int_to_ptr.vmem [resolvable:$true] %s43
      %49 = dma.hbm_to_vmem [thread:$0]  %s42, 2048, %s44, [#allocation6], 256, 256, 16
    $region13: #{tpu_custom_call.1} parent=1 // pred_fallthru
      _
    // Predicated region
    $region14: #{tpu_custom_call.1} parent=1 // pred_check
      _
    $region15: #{tpu_custom_call.1} parent=1 // pred_check_branch
      %51 = sbr.rel (0) target = $region17
    $region16: #{tpu_custom_call.1} parent=1 // pred_region
      %53 = dma.done [#allocation3], 256
    $region17: #{tpu_custom_call.1} parent=1 // pred_fallthru
      _
    // Predicated region
    $region18: #{tpu_custom_call.1} parent=1 // pred_check
      _
    $region19: #{tpu_custom_call.1} parent=1 // pred_check_branch
      %55 = sbr.rel (0) target = $region21
    $region20: #{tpu_custom_call.1} parent=1 // pred_region
      %57 = dma.done [#allocation6], 256
    $region21: #{tpu_custom_call.1} parent=1 // pred_fallthru
      _
    // Predicated region
    $region22: #{tpu_custom_call.1} parent=1 // pred_check
      _
    $region23: #{tpu_custom_call.1} parent=1 // pred_check_branch
      %59 = sbr.rel (0) target = $region25
    $region24: #{tpu_custom_call.1} parent=1 // pred_region
      %61 = dma.done [#allocation6], 2048
    $region25: #{tpu_custom_call.1} parent=1 // pred_fallthru
      _
    %v62 = vlaneseq
    %v63 = vshrl.u32 %v62, 7
    %v64 = vadd.s32 %v63, 8
    %v65 = vadd.s32 %v63, 16
    %v66 = vadd.s32 %v63, 24
    %v67 = vadd.s32 %v63, 32
    %v68 = vadd.s32 %v63, 40
    %v69 = vadd.s32 %v63, 48
    %v70 = vadd.s32 %v63, 56
    %v71 = vld [vmem:[#allocation2] sm:$0x1]
    %v72 = vld [vmem:[#allocation5] sm:$0x1]
    %v73 = vperm.slane %v71, 0
    %vm74 = vcmp.eq.s32.totalorder %v73, %v63
    %vm75 = vcmp.eq.s32.totalorder %v73, %v64
    %vm76 = vcmp.eq.s32.totalorder %v73, %v65
    %vm77 = vcmp.eq.s32.totalorder %v73, %v66
    %vm78 = vcmp.eq.s32.totalorder %v73, %v67
    %vm79 = vcmp.eq.s32.totalorder %v73, %v68
    %vm80 = vcmp.eq.s32.totalorder %v73, %v69
    %vm81 = vcmp.eq.s32.totalorder %v73, %v70
    %v82 = vperm.slane %v72, 0
    %v83 = vsel %vm74, %v82, 0.0
    %v84 = vsel %vm75, %v82, 0.0
    %v85 = vsel %vm76, %v82, 0.0
    %v86 = vsel %vm77, %v82, 0.0
    %v87 = vsel %vm78, %v82, 0.0
    %v88 = vsel %vm79, %v82, 0.0
    %v89 = vsel %vm80, %v82, 0.0
    %v90 = vsel %vm81, %v82, 0.0
    %v91 = vadd.f32 %v83, 0.0
    %v92 = vadd.f32 %v84, 0.0
    %v93 = vadd.f32 %v85, 0.0
    %v94 = vadd.f32 %v86, 0.0
    %v95 = vadd.f32 %v87, 0.0
    %v96 = vadd.f32 %v88, 0.0
    %v97 = vadd.f32 %v89, 0.0
    %v98 = vadd.f32 %v90, 0.0
    %v99 = vadd.s32 %v63, 64
    %v100 = vadd.s32 %v64, 64
    %v101 = vadd.s32 %v65, 64
    %v102 = vadd.s32 %v66, 64
    %v103 = vld [vmem:[#allocation2 + $0x1] sm:$0x1]
    %v104 = vld [vmem:[#allocation5 + $0x1] sm:$0x1]
    %v105 = vperm.slane %v103, 0
    %vm106 = vcmp.eq.s32.totalorder %v105, %v99
    %vm107 = vcmp.eq.s32.totalorder %v105, %v100
    %vm108 = vcmp.eq.s32.totalorder %v105, %v101
    %vm109 = vcmp.eq.s32.totalorder %v105, %v102
    %v110 = vperm.slane %v104, 0
    %v111 = vsel %vm106, %v110, 0.0
    %v112 = vsel %vm107, %v110, 0.0
    %v113 = vsel %vm108, %v110, 0.0
    %v114 = vsel %vm109, %v110, 0.0
    %v115 = vadd.f32 %v111, 0.0
    %v116 = vadd.f32 %v112, 0.0
    %v117 = vadd.f32 %v113, 0.0
    %v118 = vadd.f32 %v114, 0.0
    %v119 = vld [vmem:[#allocation2 + $0x2] sm:$0x1]
    %v120 = vld [vmem:[#allocation5 + $0x2] sm:$0x1]
    %v121 = vperm.slane %v119, 0
    %vm122 = vcmp.eq.s32.totalorder %v121, %v99
    %vm123 = vcmp.eq.s32.totalorder %v121, %v100
    %vm124 = vcmp.eq.s32.totalorder %v121, %v101
    %vm125 = vcmp.eq.s32.totalorder %v121, %v102
    %v126 = vperm.slane %v120, 0
    %v127 = vsel %vm122, %v126, 0.0
    %v128 = vsel %vm123, %v126, 0.0
    %v129 = vsel %vm124, %v126, 0.0
    %v130 = vsel %vm125, %v126, 0.0
    %v131 = vadd.f32 %v115, %v127
    %v132 = vadd.f32 %v116, %v128
    %v133 = vadd.f32 %v117, %v129
    %v134 = vadd.f32 %v118, %v130
    %v135 = vld [vmem:[#allocation2 + $0x3] sm:$0x1]
    %v136 = vld [vmem:[#allocation5 + $0x3] sm:$0x1]
    %v137 = vperm.slane %v135, 0
    %vm138 = vcmp.eq.s32.totalorder %v137, %v99
    %vm139 = vcmp.eq.s32.totalorder %v137, %v100
    %vm140 = vcmp.eq.s32.totalorder %v137, %v101
    %vm141 = vcmp.eq.s32.totalorder %v137, %v102
    %v142 = vperm.slane %v136, 0
    %v143 = vsel %vm138, %v142, 0.0
    %v144 = vsel %vm139, %v142, 0.0
    %v145 = vsel %vm140, %v142, 0.0
    %v146 = vsel %vm141, %v142, 0.0
    %v147 = vadd.f32 %v131, %v143
    %v148 = vadd.f32 %v132, %v144
    %v149 = vadd.f32 %v133, %v145
    %v150 = vadd.f32 %v134, %v146
    %v151 = vld [vmem:[#allocation2 + $0x4] sm:$0x1]
    %v152 = vld [vmem:[#allocation5 + $0x4] sm:$0x1]
    %v153 = vperm.slane %v151, 0
    %vm154 = vcmp.eq.s32.totalorder %v153, %v99
    %vm155 = vcmp.eq.s32.totalorder %v153, %v100
    %vm156 = vcmp.eq.s32.totalorder %v153, %v101
    %vm157 = vcmp.eq.s32.totalorder %v153, %v102
    %v158 = vperm.slane %v152, 0
    %v159 = vsel %vm154, %v158, 0.0
    %v160 = vsel %vm155, %v158, 0.0
    %v161 = vsel %vm156, %v158, 0.0
    %v162 = vsel %vm157, %v158, 0.0
    %v163 = vadd.f32 %v147, %v159
    %v164 = vadd.f32 %v148, %v160
    %v165 = vadd.f32 %v149, %v161
    %v166 = vadd.f32 %v150, %v162
    %v167 = vadd.s32 %v63, 96
    %v168 = vadd.s32 %v64, 96
    %v169 = vadd.s32 %v65, 96
    %v170 = vadd.s32 %v66, 96
    %v171 = vadd.s32 %v67, 96
    %v172 = vadd.s32 %v68, 96
    %v173 = vadd.s32 %v69, 96
    %v174 = vadd.s32 %v70, 96
    %v175 = vld [vmem:[#allocation2 + $0x5] sm:$0x1]
    %v176 = vld [vmem:[#allocation5 + $0x5] sm:$0x1]
    %v177 = vperm.slane %v175, 0
    %vm178 = vcmp.eq.s32.totalorder %v177, %v167
    %vm179 = vcmp.eq.s32.totalorder %v177, %v168
    %vm180 = vcmp.eq.s32.totalorder %v177, %v169
    %vm181 = vcmp.eq.s32.totalorder %v177, %v170
    %vm182 = vcmp.eq.s32.totalorder %v177, %v171
    %vm183 = vcmp.eq.s32.totalorder %v177, %v172
    %vm184 = vcmp.eq.s32.totalorder %v177, %v173
    %vm185 = vcmp.eq.s32.totalorder %v177, %v174
    %v186 = vperm.slane %v176, 0
    %v187 = vsel %vm178, %v186, 0.0
    %v188 = vsel %vm179, %v186, 0.0
    %v189 = vsel %vm180, %v186, 0.0
    %v190 = vsel %vm181, %v186, 0.0
    %v191 = vsel %vm182, %v186, 0.0
    %v192 = vsel %vm183, %v186, 0.0
    %v193 = vsel %vm184, %v186, 0.0
    %v194 = vsel %vm185, %v186, 0.0
    %v195 = vadd.f32 %v187, 0.0
    %v196 = vadd.f32 %v188, 0.0
    %v197 = vadd.f32 %v189, 0.0
    %v198 = vadd.f32 %v190, 0.0
    %v199 = vadd.f32 %v191, 0.0
    %v200 = vadd.f32 %v192, 0.0
    %v201 = vadd.f32 %v193, 0.0
    %v202 = vadd.f32 %v194, 0.0
    %v203 = vadd.s32 %v63, 160
    %v204 = vadd.s32 %v64, 160
    %v205 = vadd.s32 %v65, 160
    %v206 = vadd.s32 %v66, 160
    %v207 = vld [vmem:[#allocation2 + $0x6] sm:$0x1]
    %v208 = vld [vmem:[#allocation5 + $0x6] sm:$0x1]
    %v209 = vperm.slane %v207, 0
    %vm210 = vcmp.eq.s32.totalorder %v209, %v203
    %vm211 = vcmp.eq.s32.totalorder %v209, %v204
    %vm212 = vcmp.eq.s32.totalorder %v209, %v205
    %vm213 = vcmp.eq.s32.totalorder %v209, %v206
    %v214 = vperm.slane %v208, 0
    %v215 = vsel %vm210, %v214, 0.0
    %v216 = vsel %vm211, %v214, 0.0
    %v217 = vsel %vm212, %v214, 0.0
    %v218 = vsel %vm213, %v214, 0.0
    %v219 = vadd.f32 %v215, 0.0
    %v220 = vadd.f32 %v216, 0.0
    %v221 = vadd.f32 %v217, 0.0
    %v222 = vadd.f32 %v218, 0.0
    %v223 = vld [vmem:[#allocation2 + $0x7] sm:$0x1]
    %v224 = vld [vmem:[#allocation5 + $0x7] sm:$0x1]
    %v225 = vperm.slane %v223, 0
    %vm226 = vcmp.eq.s32.totalorder %v225, %v203
    %vm227 = vcmp.eq.s32.totalorder %v225, %v204
    %vm228 = vcmp.eq.s32.totalorder %v225, %v205
    %vm229 = vcmp.eq.s32.totalorder %v225, %v206
    %v230 = vperm.slane %v224, 0
    %v231 = vsel %vm226, %v230, 0.0
    %v232 = vsel %vm227, %v230, 0.0
    %v233 = vsel %vm228, %v230, 0.0
    %v234 = vsel %vm229, %v230, 0.0
    %v235 = vadd.f32 %v219, %v231
    %v236 = vadd.f32 %v220, %v232
    %v237 = vadd.f32 %v221, %v233
    %v238 = vadd.f32 %v222, %v234
    %v239 = vld [vmem:[#allocation2 + $0x8] sm:$0x1]
    %v240 = vld [vmem:[#allocation5 + $0x8] sm:$0x1]
    %v241 = vperm.slane %v239, 0
    %vm242 = vcmp.eq.s32.totalorder %v241, %v203
    %vm243 = vcmp.eq.s32.totalorder %v241, %v204
    %vm244 = vcmp.eq.s32.totalorder %v241, %v205
    %vm245 = vcmp.eq.s32.totalorder %v241, %v206
    %v246 = vperm.slane %v240, 0
    %v247 = vsel %vm242, %v246, 0.0
    %v248 = vsel %vm243, %v246, 0.0
    %v249 = vsel %vm244, %v246, 0.0
    %v250 = vsel %vm245, %v246, 0.0
    %v251 = vadd.f32 %v235, %v247
    %v252 = vadd.f32 %v236, %v248
    %v253 = vadd.f32 %v237, %v249
    %v254 = vadd.f32 %v238, %v250
    %v255 = vld [vmem:[#allocation2 + $0x9] sm:$0x1]
    %v256 = vld [vmem:[#allocation5 + $0x9] sm:$0x1]
    %v257 = vperm.slane %v255, 0
    %vm258 = vcmp.eq.s32.totalorder %v257, %v203
    %vm259 = vcmp.eq.s32.totalorder %v257, %v204
    %vm260 = vcmp.eq.s32.totalorder %v257, %v205
    %vm261 = vcmp.eq.s32.totalorder %v257, %v206
    %v262 = vperm.slane %v256, 0
    %v263 = vsel %vm258, %v262, 0.0
    %v264 = vsel %vm259, %v262, 0.0
    %v265 = vsel %vm260, %v262, 0.0
    %v266 = vsel %vm261, %v262, 0.0
    %v267 = vadd.f32 %v251, %v263
    %v268 = vadd.f32 %v252, %v264
    %v269 = vadd.f32 %v253, %v265
    %v270 = vadd.f32 %v254, %v266
    %v271 = vld [vmem:[#allocation7] sm:$0xff]
    %v272 = vld [vmem:[#allocation7 + $0x8] sm:$0xff]
    %v273 = vld [vmem:[#allocation7 + $0x10] sm:$0xff]
    %v274 = vld [vmem:[#allocation7 + $0x18] sm:$0xff]
    %v275 = vld [vmem:[#allocation7 + $0x20] sm:$0xff]
    %v276 = vld [vmem:[#allocation7 + $0x28] sm:$0xff]
    %v277 = vld [vmem:[#allocation7 + $0x30] sm:$0xff]
    %v278 = vld [vmem:[#allocation7 + $0x38] sm:$0xff]
    %v279 = vld [vmem:[#allocation7 + $0x40] sm:$0xff]
    %v280 = vld [vmem:[#allocation7 + $0x48] sm:$0xff]
    %v281 = vld [vmem:[#allocation7 + $0x50] sm:$0xff]
    %v282 = vld [vmem:[#allocation7 + $0x58] sm:$0xff]
    %v283 = vld [vmem:[#allocation7 + $0x60] sm:$0xff]
    %v284 = vld [vmem:[#allocation7 + $0x68] sm:$0xff]
    %v285 = vld [vmem:[#allocation7 + $0x70] sm:$0xff]
    %v286 = vld [vmem:[#allocation7 + $0x78] sm:$0xff]
    %287 = vmatpush.msra.mxu0 %v198
    %288 = vmatpush.msra.mxu0 %v197
    %289 = vmatpush.msra.mxu0 %v196
    %290 = vmatpush.msra.mxu0 %v195
    %291 = vmatpush.msra.mxu0 %v166
    %292 = vmatpush.msra.mxu0 %v165
    %293 = vmatpush.msra.mxu0 %v164
    %294 = vmatpush.msra.mxu0 %v163
    %295 = vmatpush.msra.mxu0 %v98
    %296 = vmatpush.msra.mxu0 %v97
    %297 = vmatpush.msra.mxu0 %v96
    %298 = vmatpush.msra.mxu0 %v95
    %299 = vmatpush.msra.mxu0 %v94
    %300 = vmatpush.msra.mxu0 %v93
    %301 = vmatpush.msra.mxu0 %v92
    %302 = vmatpush.msra.mxu0 %v91
    %303 = vmatmul.f32.gmra.mxu0 %v271
    %v304 = vpop.f32.mrf.mxu0
    %v305 = vadd.f32 0.0, %v304
    %306 = vmatmul.f32.gmra.mxu0 %v273
    %v307 = vpop.f32.mrf.mxu0
    %v308 = vadd.f32 0.0, %v307
    %309 = vmatmul.f32.gmra.mxu0 %v275
    %v310 = vpop.f32.mrf.mxu0
    %v311 = vadd.f32 0.0, %v310
    %312 = vmatmul.f32.gmra.mxu0 %v277
    %v313 = vpop.f32.mrf.mxu0
    %v314 = vadd.f32 0.0, %v313
    %315 = vmatmul.f32.gmra.mxu0 %v279
    %v316 = vpop.f32.mrf.mxu0
    %v317 = vadd.f32 0.0, %v316
    %318 = vmatmul.f32.gmra.mxu0 %v281
    %v319 = vpop.f32.mrf.mxu0
    %v320 = vadd.f32 0.0, %v319
    %321 = vmatmul.f32.gmra.mxu0 %v283
    %v322 = vpop.f32.mrf.mxu0
    %v323 = vadd.f32 0.0, %v322
    %324 = vmatmul.f32.gmra.mxu0 %v285
    %v325 = vpop.f32.mrf.mxu0
    %v326 = vadd.f32 0.0, %v325
    %327 = vdwg.mxu0
    %328 = vmatpush.msra.mxu0 0.0
    %329 = vmatpush.msra.mxu0 0.0
    %330 = vmatpush.msra.mxu0 0.0
    %331 = vmatpush.msra.mxu0 0.0
    %332 = vmatpush.msra.mxu0 0.0
    %333 = vmatpush.msra.mxu0 0.0
    %334 = vmatpush.msra.mxu0 0.0
    %335 = vmatpush.msra.mxu0 0.0
    %336 = vmatpush.msra.mxu0 %v270
    %337 = vmatpush.msra.mxu0 %v269
    %338 = vmatpush.msra.mxu0 %v268
    %339 = vmatpush.msra.mxu0 %v267
    %340 = vmatpush.msra.mxu0 %v202
    %341 = vmatpush.msra.mxu0 %v201
    %342 = vmatpush.msra.mxu0 %v200
    %343 = vmatpush.msra.mxu0 %v199
    %344 = vmatmul.f32.gmra.mxu0 %v272
    %v345 = vpop.f32.mrf.mxu0
    %v346 = vadd.f32 %v305, %v345
    %347 = vmatmul.f32.gmra.mxu0 %v274
    %v348 = vpop.f32.mrf.mxu0
    %v349 = vadd.f32 %v308, %v348
    %350 = vmatmul.f32.gmra.mxu0 %v276
    %v351 = vpop.f32.mrf.mxu0
    %v352 = vadd.f32 %v311, %v351
    %353 = vmatmul.f32.gmra.mxu0 %v278
    %v354 = vpop.f32.mrf.mxu0
    %v355 = vadd.f32 %v314, %v354
    %356 = vmatmul.f32.gmra.mxu0 %v280
    %v357 = vpop.f32.mrf.mxu0
    %v358 = vadd.f32 %v317, %v357
    %359 = vmatmul.f32.gmra.mxu0 %v282
    %v360 = vpop.f32.mrf.mxu0
    %v361 = vadd.f32 %v320, %v360
    %362 = vmatmul.f32.gmra.mxu0 %v284
    %v363 = vpop.f32.mrf.mxu0
    %v364 = vadd.f32 %v323, %v363
    %365 = vmatmul.f32.gmra.mxu0 %v286
    %v366 = vpop.f32.mrf.mxu0
    %v367 = vadd.f32 %v326, %v366
    %368 = vdwg.mxu0
    %v369 = vmul.f32 %v346, %v358
    %v370 = vmul.f32 %v349, %v361
    %v371 = vmul.f32 %v352, %v364
    %v372 = vmul.f32 %v355, %v367
    %v373 = vadd.f32 %v369, %v370
    %v374 = vadd.f32 %v373, %v371
    %v375 = vadd.f32 %v374, %v372
    %v376 = vrot.slane %v375, 4
    %v377 = vadd.f32 %v375, %v376
    %v378 = vrot.slane %v377, 2
    %v379 = vadd.f32 %v377, %v378
    %v380 = vrot.slane %v379, 1
    %v381 = vadd.f32 %v379, %v380
    %382 = vst [vmem:[#allocation8] sm:$0x1] %v381
    // Predicated region
    $region26: #{tpu_custom_call.1} parent=1 // pred_check
      _
    $region27: #{tpu_custom_call.1} parent=1 // pred_check_branch
      %384 = sbr.rel (0) target = $region29
    $region28: #{tpu_custom_call.1} parent=1 // pred_region
      %386 = vsyncadd [#allocation4], 0
      %s388 = sshll.u32 [#allocation8], 4
      %s389 = int_to_ptr.vmem [resolvable:$true] %s388
      %s390 = sshll.u32 %s3, 4
      %s391 = int_to_ptr.hbm [resolvable:$true] %s390
      %393 = dma.vmem_to_hbm [thread:$0]  %s389, 16, %s391, [#allocation4]
    $region29: #{tpu_custom_call.1} parent=1 // pred_fallthru
      _
    // Predicated region
    $region30: #{tpu_custom_call.1} parent=1 // pred_check
      _
    $region31: #{tpu_custom_call.1} parent=1 // pred_check_branch
      %395 = sbr.rel (0) target = $region33
    $region32: #{tpu_custom_call.1} parent=1 // pred_region
      %397 = dma.done [#allocation4], 16
    $region33: #{tpu_custom_call.1} parent=1 // pred_fallthru
      _
    %398 = vsyncpa [#allocation3], 1
    %399 = vsyncpa [#allocation6], 1
    %400 = vsyncpa [#allocation4], 1

// kernel: tpu_custom_call.1
$region0: #{tpu_custom_call.1}
  #allocation0 [shape = 'u32[]', space=smem, size = 0x4, offset = 0x4, fixed_abs, tag = 'smem constant byte address 0x4 - core index']
  #allocation1 [shape = 'u32[72,128]{1,0:T(1,128)}', space=vmem, size = 0x9000, scoped, tag = 'internal scratch']
  %s0 = inlined_call_operand.hbm [shape: s32[10,128], index: 0, kind: input, shape index: {}]
  %s1 = inlined_call_operand.hbm [shape: f32[10,128], index: 1, kind: input, shape index: {}]
  %s2 = inlined_call_operand.hbm [shape: f32[64,256], index: 2, kind: input, shape index: {}]
  %s3 = inlined_call_operand.hbm [shape: f32[1,128], index: 3, kind: output, shape index: {}]
  %s4 = sld [smem:[#allocation0]]
  $region34: #{tpu_custom_call.1} parent=0
    _
  %s6 = ssub.s32 1, %s4
  %s7 = scalar_select 0, %s6, %s4
  $region1: #{tpu_custom_call.1} parent=0
    #allocation2 [shape = 'u8[8192]{0}', space=vmem, size = 0x2000, scoped, tag = 'input window, operand 0, single buffered']
    #allocation3 [shape = 's32[1]{0}', space=sflag, size = 0x4, scoped, tag = 'scoped memory for tpu_custom_call.1']
    #allocation4 [shape = 's32[1]{0}', space=sflag, size = 0x4, scoped, tag = 'scoped memory for tpu_custom_call.1']
    #allocation5 [shape = 'u8[8192]{0}', space=vmem, size = 0x2000, scoped, tag = 'input window, operand 1, single buffered']
    #allocation6 [shape = 's32[1]{0}', space=sflag, size = 0x4, scoped, tag = 'scoped memory for tpu_custom_call.1']
    #allocation7 [shape = 'u8[65536]{0}', space=vmem, size = 0x10000, scoped, tag = 'input window, operand 2, single buffered']
    #allocation8 [shape = 'u8[512]{0}', space=vmem, size = 0x400, scoped, tag = 'output window, operand 0, single buffered']
    %8 = vsyncpa [#allocation3], 0
    %9 = vsyncpa [#allocation6], 0
    %10 = vsyncpa [#allocation4], 0
    // Predicated region
    $region2: #{tpu_custom_call.1} parent=1 // pred_check
      _
    $region3: #{tpu_custom_call.1} parent=1 // pred_check_branch
      %12 = sbr.rel (0) target = $region5
    $region4: #{tpu_custom_call.1} parent=1 // pred_region
      %14 = vsyncadd [#allocation3], 0
      %s15 = sshll.u32 %s0, 4
      %s16 = int_to_ptr.hbm [resolvable:$true] %s15
      %s17 = sshll.u32 [#allocation2], 4
      %s18 = int_to_ptr.vmem [resolvable:$true] %s17
      %23 = dma.hbm_to_vmem [thread:$0]  %s16, 256, %s18, [#allocation3], 128, 128, 8
    $region5: #{tpu_custom_call.1} parent=1 // pred_fallthru
      _
    // Predicated region
    $region6: #{tpu_custom_call.1} parent=1 // pred_check
      _
    $region7: #{tpu_custom_call.1} parent=1 // pred_check_branch
      %25 = sbr.rel (0) target = $region9
    $region8: #{tpu_custom_call.1} parent=1 // pred_region
      %27 = vsyncadd [#allocation6], 0
      %s28 = sshll.u32 %s1, 4
      %s29 = int_to_ptr.hbm [resolvable:$true] %s28
      %s30 = sshll.u32 [#allocation5], 4
      %s31 = int_to_ptr.vmem [resolvable:$true] %s30
      %36 = dma.hbm_to_vmem [thread:$0]  %s29, 256, %s31, [#allocation6], 128, 128, 8
    $region9: #{tpu_custom_call.1} parent=1 // pred_fallthru
      _
    // Predicated region
    $region10: #{tpu_custom_call.1} parent=1 // pred_check
      _
    $region11: #{tpu_custom_call.1} parent=1 // pred_check_branch
      %38 = sbr.rel (0) target = $region13
    $region12: #{tpu_custom_call.1} parent=1 // pred_region
      %40 = vsyncadd [#allocation6], 0
      %s41 = sshll.u32 %s2, 4
      %s42 = int_to_ptr.hbm [resolvable:$true] %s41
      %s43 = sshll.u32 [#allocation7], 4
      %s44 = int_to_ptr.vmem [resolvable:$true] %s43
      %49 = dma.hbm_to_vmem [thread:$0]  %s42, 2048, %s44, [#allocation6], 256, 256, 16
    $region13: #{tpu_custom_call.1} parent=1 // pred_fallthru
      _
    // Predicated region
    $region14: #{tpu_custom_call.1} parent=1 // pred_check
      _
    $region15: #{tpu_custom_call.1} parent=1 // pred_check_branch
      %51 = sbr.rel (0) target = $region17
    $region16: #{tpu_custom_call.1} parent=1 // pred_region
      %53 = dma.done [#allocation3], 256
    $region17: #{tpu_custom_call.1} parent=1 // pred_fallthru
      _
    // Predicated region
    $region18: #{tpu_custom_call.1} parent=1 // pred_check
      _
    $region19: #{tpu_custom_call.1} parent=1 // pred_check_branch
      %55 = sbr.rel (0) target = $region21
    $region20: #{tpu_custom_call.1} parent=1 // pred_region
      %57 = dma.done [#allocation6], 256
    $region21: #{tpu_custom_call.1} parent=1 // pred_fallthru
      _
    // Predicated region
    $region22: #{tpu_custom_call.1} parent=1 // pred_check
      _
    $region23: #{tpu_custom_call.1} parent=1 // pred_check_branch
      %59 = sbr.rel (0) target = $region25
    $region24: #{tpu_custom_call.1} parent=1 // pred_region
      %61 = dma.done [#allocation6], 2048
    $region25: #{tpu_custom_call.1} parent=1 // pred_fallthru
      _
    %v62 = vlaneseq
    %v63 = vshrl.u32 %v62, 7
    %v64 = vadd.s32 %v63, 8
    %v65 = vadd.s32 %v63, 16
    %v66 = vadd.s32 %v63, 24
    %v67 = vadd.s32 %v63, 32
    %v68 = vadd.s32 %v63, 40
    %v69 = vadd.s32 %v63, 48
    %v70 = vadd.s32 %v63, 56
    %v71 = vld [vmem:[#allocation2] sm:$0x1]
    %v72 = vld [vmem:[#allocation5] sm:$0x1]
    %v73 = vperm.slane %v71, 0
    %vm74 = vcmp.eq.s32.totalorder %v73, %v63
    %vm75 = vcmp.eq.s32.totalorder %v73, %v64
    %vm76 = vcmp.eq.s32.totalorder %v73, %v65
    %vm77 = vcmp.eq.s32.totalorder %v73, %v66
    %vm78 = vcmp.eq.s32.totalorder %v73, %v67
    %vm79 = vcmp.eq.s32.totalorder %v73, %v68
    %vm80 = vcmp.eq.s32.totalorder %v73, %v69
    %vm81 = vcmp.eq.s32.totalorder %v73, %v70
    %v82 = vperm.slane %v72, 0
    %v83 = vsel %vm74, %v82, 0.0
    %v84 = vsel %vm75, %v82, 0.0
    %v85 = vsel %vm76, %v82, 0.0
    %v86 = vsel %vm77, %v82, 0.0
    %v87 = vsel %vm78, %v82, 0.0
    %v88 = vsel %vm79, %v82, 0.0
    %v89 = vsel %vm80, %v82, 0.0
    %v90 = vsel %vm81, %v82, 0.0
    %v91 = vadd.f32 %v83, 0.0
    %v92 = vadd.f32 %v84, 0.0
    %v93 = vadd.f32 %v85, 0.0
    %v94 = vadd.f32 %v86, 0.0
    %v95 = vadd.f32 %v87, 0.0
    %v96 = vadd.f32 %v88, 0.0
    %v97 = vadd.f32 %v89, 0.0
    %v98 = vadd.f32 %v90, 0.0
    %v99 = vadd.s32 %v63, 64
    %v100 = vadd.s32 %v64, 64
    %v101 = vadd.s32 %v65, 64
    %v102 = vadd.s32 %v66, 64
    %v103 = vld [vmem:[#allocation2 + $0x1] sm:$0x1]
    %v104 = vld [vmem:[#allocation5 + $0x1] sm:$0x1]
    %v105 = vperm.slane %v103, 0
    %vm106 = vcmp.eq.s32.totalorder %v105, %v99
    %vm107 = vcmp.eq.s32.totalorder %v105, %v100
    %vm108 = vcmp.eq.s32.totalorder %v105, %v101
    %vm109 = vcmp.eq.s32.totalorder %v105, %v102
    %v110 = vperm.slane %v104, 0
    %v111 = vsel %vm106, %v110, 0.0
    %v112 = vsel %vm107, %v110, 0.0
    %v113 = vsel %vm108, %v110, 0.0
    %v114 = vsel %vm109, %v110, 0.0
    %v115 = vadd.f32 %v111, 0.0
    %v116 = vadd.f32 %v112, 0.0
    %v117 = vadd.f32 %v113, 0.0
    %v118 = vadd.f32 %v114, 0.0
    %v119 = vld [vmem:[#allocation2 + $0x2] sm:$0x1]
    %v120 = vld [vmem:[#allocation5 + $0x2] sm:$0x1]
    %v121 = vperm.slane %v119, 0
    %vm122 = vcmp.eq.s32.totalorder %v121, %v99
    %vm123 = vcmp.eq.s32.totalorder %v121, %v100
    %vm124 = vcmp.eq.s32.totalorder %v121, %v101
    %vm125 = vcmp.eq.s32.totalorder %v121, %v102
    %v126 = vperm.slane %v120, 0
    %v127 = vsel %vm122, %v126, 0.0
    %v128 = vsel %vm123, %v126, 0.0
    %v129 = vsel %vm124, %v126, 0.0
    %v130 = vsel %vm125, %v126, 0.0
    %v131 = vadd.f32 %v115, %v127
    %v132 = vadd.f32 %v116, %v128
    %v133 = vadd.f32 %v117, %v129
    %v134 = vadd.f32 %v118, %v130
    %v135 = vld [vmem:[#allocation2 + $0x3] sm:$0x1]
    %v136 = vld [vmem:[#allocation5 + $0x3] sm:$0x1]
    %v137 = vperm.slane %v135, 0
    %vm138 = vcmp.eq.s32.totalorder %v137, %v99
    %vm139 = vcmp.eq.s32.totalorder %v137, %v100
    %vm140 = vcmp.eq.s32.totalorder %v137, %v101
    %vm141 = vcmp.eq.s32.totalorder %v137, %v102
    %v142 = vperm.slane %v136, 0
    %v143 = vsel %vm138, %v142, 0.0
    %v144 = vsel %vm139, %v142, 0.0
    %v145 = vsel %vm140, %v142, 0.0
    %v146 = vsel %vm141, %v142, 0.0
    %v147 = vadd.f32 %v131, %v143
    %v148 = vadd.f32 %v132, %v144
    %v149 = vadd.f32 %v133, %v145
    %v150 = vadd.f32 %v134, %v146
    %v151 = vld [vmem:[#allocation2 + $0x4] sm:$0x1]
    %v152 = vld [vmem:[#allocation5 + $0x4] sm:$0x1]
    %v153 = vperm.slane %v151, 0
    %vm154 = vcmp.eq.s32.totalorder %v153, %v99
    %vm155 = vcmp.eq.s32.totalorder %v153, %v100
    %vm156 = vcmp.eq.s32.totalorder %v153, %v101
    %vm157 = vcmp.eq.s32.totalorder %v153, %v102
    %v158 = vperm.slane %v152, 0
    %v159 = vsel %vm154, %v158, 0.0
    %v160 = vsel %vm155, %v158, 0.0
    %v161 = vsel %vm156, %v158, 0.0
    %v162 = vsel %vm157, %v158, 0.0
    %v163 = vadd.f32 %v147, %v159
    %v164 = vadd.f32 %v148, %v160
    %v165 = vadd.f32 %v149, %v161
    %v166 = vadd.f32 %v150, %v162
    %v167 = vadd.s32 %v63, 96
    %v168 = vadd.s32 %v64, 96
    %v169 = vadd.s32 %v65, 96
    %v170 = vadd.s32 %v66, 96
    %v171 = vadd.s32 %v67, 96
    %v172 = vadd.s32 %v68, 96
    %v173 = vadd.s32 %v69, 96
    %v174 = vadd.s32 %v70, 96
    %v175 = vld [vmem:[#allocation2 + $0x5] sm:$0x1]
    %v176 = vld [vmem:[#allocation5 + $0x5] sm:$0x1]
    %v177 = vperm.slane %v175, 0
    %vm178 = vcmp.eq.s32.totalorder %v177, %v167
    %vm179 = vcmp.eq.s32.totalorder %v177, %v168
    %vm180 = vcmp.eq.s32.totalorder %v177, %v169
    %vm181 = vcmp.eq.s32.totalorder %v177, %v170
    %vm182 = vcmp.eq.s32.totalorder %v177, %v171
    %vm183 = vcmp.eq.s32.totalorder %v177, %v172
    %vm184 = vcmp.eq.s32.totalorder %v177, %v173
    %vm185 = vcmp.eq.s32.totalorder %v177, %v174
    %v186 = vperm.slane %v176, 0
    %v187 = vsel %vm178, %v186, 0.0
    %v188 = vsel %vm179, %v186, 0.0
    %v189 = vsel %vm180, %v186, 0.0
    %v190 = vsel %vm181, %v186, 0.0
    %v191 = vsel %vm182, %v186, 0.0
    %v192 = vsel %vm183, %v186, 0.0
    %v193 = vsel %vm184, %v186, 0.0
    %v194 = vsel %vm185, %v186, 0.0
    %v195 = vadd.f32 %v187, 0.0
    %v196 = vadd.f32 %v188, 0.0
    %v197 = vadd.f32 %v189, 0.0
    %v198 = vadd.f32 %v190, 0.0
    %v199 = vadd.f32 %v191, 0.0
    %v200 = vadd.f32 %v192, 0.0
    %v201 = vadd.f32 %v193, 0.0
    %v202 = vadd.f32 %v194, 0.0
    %v203 = vadd.s32 %v63, 160
    %v204 = vadd.s32 %v64, 160
    %v205 = vadd.s32 %v65, 160
    %v206 = vadd.s32 %v66, 160
    %v207 = vld [vmem:[#allocation2 + $0x6] sm:$0x1]
    %v208 = vld [vmem:[#allocation5 + $0x6] sm:$0x1]
    %v209 = vperm.slane %v207, 0
    %vm210 = vcmp.eq.s32.totalorder %v209, %v203
    %vm211 = vcmp.eq.s32.totalorder %v209, %v204
    %vm212 = vcmp.eq.s32.totalorder %v209, %v205
    %vm213 = vcmp.eq.s32.totalorder %v209, %v206
    %v214 = vperm.slane %v208, 0
    %v215 = vsel %vm210, %v214, 0.0
    %v216 = vsel %vm211, %v214, 0.0
    %v217 = vsel %vm212, %v214, 0.0
    %v218 = vsel %vm213, %v214, 0.0
    %v219 = vadd.f32 %v215, 0.0
    %v220 = vadd.f32 %v216, 0.0
    %v221 = vadd.f32 %v217, 0.0
    %v222 = vadd.f32 %v218, 0.0
    %v223 = vld [vmem:[#allocation2 + $0x7] sm:$0x1]
    %v224 = vld [vmem:[#allocation5 + $0x7] sm:$0x1]
    %v225 = vperm.slane %v223, 0
    %vm226 = vcmp.eq.s32.totalorder %v225, %v203
    %vm227 = vcmp.eq.s32.totalorder %v225, %v204
    %vm228 = vcmp.eq.s32.totalorder %v225, %v205
    %vm229 = vcmp.eq.s32.totalorder %v225, %v206
    %v230 = vperm.slane %v224, 0
    %v231 = vsel %vm226, %v230, 0.0
    %v232 = vsel %vm227, %v230, 0.0
    %v233 = vsel %vm228, %v230, 0.0
    %v234 = vsel %vm229, %v230, 0.0
    %v235 = vadd.f32 %v219, %v231
    %v236 = vadd.f32 %v220, %v232
    %v237 = vadd.f32 %v221, %v233
    %v238 = vadd.f32 %v222, %v234
    %v239 = vld [vmem:[#allocation2 + $0x8] sm:$0x1]
    %v240 = vld [vmem:[#allocation5 + $0x8] sm:$0x1]
    %v241 = vperm.slane %v239, 0
    %vm242 = vcmp.eq.s32.totalorder %v241, %v203
    %vm243 = vcmp.eq.s32.totalorder %v241, %v204
    %vm244 = vcmp.eq.s32.totalorder %v241, %v205
    %vm245 = vcmp.eq.s32.totalorder %v241, %v206
    %v246 = vperm.slane %v240, 0
    %v247 = vsel %vm242, %v246, 0.0
    %v248 = vsel %vm243, %v246, 0.0
    %v249 = vsel %vm244, %v246, 0.0
    %v250 = vsel %vm245, %v246, 0.0
    %v251 = vadd.f32 %v235, %v247
    %v252 = vadd.f32 %v236, %v248
    %v253 = vadd.f32 %v237, %v249
    %v254 = vadd.f32 %v238, %v250
    %v255 = vld [vmem:[#allocation2 + $0x9] sm:$0x1]
    %v256 = vld [vmem:[#allocation5 + $0x9] sm:$0x1]
    %v257 = vperm.slane %v255, 0
    %vm258 = vcmp.eq.s32.totalorder %v257, %v203
    %vm259 = vcmp.eq.s32.totalorder %v257, %v204
    %vm260 = vcmp.eq.s32.totalorder %v257, %v205
    %vm261 = vcmp.eq.s32.totalorder %v257, %v206
    %v262 = vperm.slane %v256, 0
    %v263 = vsel %vm258, %v262, 0.0
    %v264 = vsel %vm259, %v262, 0.0
    %v265 = vsel %vm260, %v262, 0.0
    %v266 = vsel %vm261, %v262, 0.0
    %v267 = vadd.f32 %v251, %v263
    %v268 = vadd.f32 %v252, %v264
    %v269 = vadd.f32 %v253, %v265
    %v270 = vadd.f32 %v254, %v266
    %v271 = vld [vmem:[#allocation7] sm:$0xff]
    %v272 = vld [vmem:[#allocation7 + $0x8] sm:$0xff]
    %v273 = vld [vmem:[#allocation7 + $0x10] sm:$0xff]
    %v274 = vld [vmem:[#allocation7 + $0x18] sm:$0xff]
    %v275 = vld [vmem:[#allocation7 + $0x20] sm:$0xff]
    %v276 = vld [vmem:[#allocation7 + $0x28] sm:$0xff]
    %v277 = vld [vmem:[#allocation7 + $0x30] sm:$0xff]
    %v278 = vld [vmem:[#allocation7 + $0x38] sm:$0xff]
    %v279 = vld [vmem:[#allocation7 + $0x40] sm:$0xff]
    %v280 = vld [vmem:[#allocation7 + $0x48] sm:$0xff]
    %v281 = vld [vmem:[#allocation7 + $0x50] sm:$0xff]
    %v282 = vld [vmem:[#allocation7 + $0x58] sm:$0xff]
    %v283 = vld [vmem:[#allocation7 + $0x60] sm:$0xff]
    %v284 = vld [vmem:[#allocation7 + $0x68] sm:$0xff]
    %v285 = vld [vmem:[#allocation7 + $0x70] sm:$0xff]
    %v286 = vld [vmem:[#allocation7 + $0x78] sm:$0xff]
    %287 = vmatpush.msra.mxu0 %v198
    %288 = vmatpush.msra.mxu0 %v197
    %289 = vmatpush.msra.mxu0 %v196
    %290 = vmatpush.msra.mxu0 %v195
    %291 = vmatpush.msra.mxu0 %v166
    %292 = vmatpush.msra.mxu0 %v165
    %293 = vmatpush.msra.mxu0 %v164
    %294 = vmatpush.msra.mxu0 %v163
    %295 = vmatpush.msra.mxu0 %v98
    %296 = vmatpush.msra.mxu0 %v97
    %297 = vmatpush.msra.mxu0 %v96
    %298 = vmatpush.msra.mxu0 %v95
    %299 = vmatpush.msra.mxu0 %v94
    %300 = vmatpush.msra.mxu0 %v93
    %301 = vmatpush.msra.mxu0 %v92
    %302 = vmatpush.msra.mxu0 %v91
    %303 = vmatmul.f32.gmra.mxu0 %v271
    %v304 = vpop.f32.mrf.mxu0
    %v305 = vadd.f32 0.0, %v304
    %306 = vmatmul.f32.gmra.mxu0 %v273
    %v307 = vpop.f32.mrf.mxu0
    %v308 = vadd.f32 0.0, %v307
    %309 = vmatmul.f32.gmra.mxu0 %v275
    %v310 = vpop.f32.mrf.mxu0
    %v311 = vadd.f32 0.0, %v310
    %312 = vmatmul.f32.gmra.mxu0 %v277
    %v313 = vpop.f32.mrf.mxu0
    %v314 = vadd.f32 0.0, %v313
    %315 = vmatmul.f32.gmra.mxu0 %v279
    %v316 = vpop.f32.mrf.mxu0
    %v317 = vadd.f32 0.0, %v316
    %318 = vmatmul.f32.gmra.mxu0 %v281
    %v319 = vpop.f32.mrf.mxu0
    %v320 = vadd.f32 0.0, %v319
    %321 = vmatmul.f32.gmra.mxu0 %v283
    %v322 = vpop.f32.mrf.mxu0
    %v323 = vadd.f32 0.0, %v322
    %324 = vmatmul.f32.gmra.mxu0 %v285
    %v325 = vpop.f32.mrf.mxu0
    %v326 = vadd.f32 0.0, %v325
    %327 = vdwg.mxu0
    %328 = vmatpush.msra.mxu0 0.0
    %329 = vmatpush.msra.mxu0 0.0
    %330 = vmatpush.msra.mxu0 0.0
    %331 = vmatpush.msra.mxu0 0.0
    %332 = vmatpush.msra.mxu0 0.0
    %333 = vmatpush.msra.mxu0 0.0
    %334 = vmatpush.msra.mxu0 0.0
    %335 = vmatpush.msra.mxu0 0.0
    %336 = vmatpush.msra.mxu0 %v270
    %337 = vmatpush.msra.mxu0 %v269
    %338 = vmatpush.msra.mxu0 %v268
    %339 = vmatpush.msra.mxu0 %v267
    %340 = vmatpush.msra.mxu0 %v202
    %341 = vmatpush.msra.mxu0 %v201
    %342 = vmatpush.msra.mxu0 %v200
    %343 = vmatpush.msra.mxu0 %v199
    %344 = vmatmul.f32.gmra.mxu0 %v272
    %v345 = vpop.f32.mrf.mxu0
    %v346 = vadd.f32 %v305, %v345
    %347 = vmatmul.f32.gmra.mxu0 %v274
    %v348 = vpop.f32.mrf.mxu0
    %v349 = vadd.f32 %v308, %v348
    %350 = vmatmul.f32.gmra.mxu0 %v276
    %v351 = vpop.f32.mrf.mxu0
    %v352 = vadd.f32 %v311, %v351
    %353 = vmatmul.f32.gmra.mxu0 %v278
    %v354 = vpop.f32.mrf.mxu0
    %v355 = vadd.f32 %v314, %v354
    %356 = vmatmul.f32.gmra.mxu0 %v280
    %v357 = vpop.f32.mrf.mxu0
    %v358 = vadd.f32 %v317, %v357
    %359 = vmatmul.f32.gmra.mxu0 %v282
    %v360 = vpop.f32.mrf.mxu0
    %v361 = vadd.f32 %v320, %v360
    %362 = vmatmul.f32.gmra.mxu0 %v284
    %v363 = vpop.f32.mrf.mxu0
    %v364 = vadd.f32 %v323, %v363
    %365 = vmatmul.f32.gmra.mxu0 %v286
    %v366 = vpop.f32.mrf.mxu0
    %v367 = vadd.f32 %v326, %v366
    %368 = vdwg.mxu0
    %v369 = vmul.f32 %v346, %v358
    %v370 = vmul.f32 %v349, %v361
    %v371 = vmul.f32 %v352, %v364
    %v372 = vmul.f32 %v355, %v367
    %v373 = vadd.f32 %v369, %v370
    %v374 = vadd.f32 %v373, %v371
    %v375 = vadd.f32 %v374, %v372
    %v376 = vrot.slane %v375, 4
    %v377 = vadd.f32 %v375, %v376
    %v378 = vrot.slane %v377, 2
    %v379 = vadd.f32 %v377, %v378
    %v380 = vrot.slane %v379, 1
    %v381 = vadd.f32 %v379, %v380
    %382 = vst [vmem:[#allocation8] sm:$0x1] %v381
    // Predicated region
    $region26: #{tpu_custom_call.1} parent=1 // pred_check
      _
    $region27: #{tpu_custom_call.1} parent=1 // pred_check_branch
      %384 = sbr.rel (0) target = $region29
    $region28: #{tpu_custom_call.1} parent=1 // pred_region
      %386 = vsyncadd [#allocation4], 0
      %s388 = sshll.u32 [#allocation8], 4
      %s389 = int_to_ptr.vmem [resolvable:$true] %s388
      %s390 = sshll.u32 %s3, 4
      %s391 = int_to_ptr.hbm [resolvable:$true] %s390
      %393 = dma.vmem_to_hbm [thread:$0]  %s389, 16, %s391, [#allocation4]
    $region29: #{tpu_custom_call.1} parent=1 // pred_fallthru
      _
    // Predicated region
    $region30: #{tpu_custom_call.1} parent=1 // pred_check
      _
    $region31: #{tpu_custom_call.1} parent=1 // pred_check_branch
      %395 = sbr.rel (0) target = $region33
    $region32: #{tpu_custom_call.1} parent=1 // pred_region
      %397 = dma.done [#allocation4], 16
    $region33: #{tpu_custom_call.1} parent=1 // pred_fallthru
      _
    %398 = vsyncpa [#allocation3], 1
    %399 = vsyncpa [#allocation6], 1
    %400 = vsyncpa [#allocation4], 1

</llo_original>
